<compile_context>
chip_gen: v5e
topology: v5e:2x2
jax: 0.10.0
libtpu: 0.0.40
codegen_flags: <defaults>
</compile_context>

<pallas_src>
import math

import jax
import jax.numpy as jnp
from jax.experimental import pallas as pl
from jax.experimental.pallas import tpu as pltpu


LANE = 128      # last dims padded to multiples of 128 (lane-dense)
SUBLANE = 8     # batch tile rows padded to multiples of 8


def _round_up(x, m):
    return (x + m - 1) // m * m


def vnet_kernel(x_ref, w1_ref, b1_ref, w2_ref, b2_ref, w3_ref, b3_ref, o_ref):
    """Fused VNet forward: 3 MXU matmuls (bf16 operands, f32 acc) + tanh/tanh/sigmoid."""
    x = x_ref[...].astype(jnp.bfloat16)
    z1 = jnp.dot(x, w1_ref[...], preferred_element_type=jnp.float32) + b1_ref[...]
    h1 = jnp.tanh(z1).astype(jnp.bfloat16)      # activation math in f32, bf16 into next MXU pass
    z2 = jnp.dot(h1, w2_ref[...], preferred_element_type=jnp.float32) + b2_ref[...]
    h2 = jnp.tanh(z2).astype(jnp.bfloat16)
    z3 = jnp.dot(h2, w3_ref[...], preferred_element_type=jnp.float32) + b3_ref[...]
    # sigmoid(z) = 1 / (1 + exp(-z)); exp and approx reciprocal both go to the EUP slot.
    o_ref[...] = pl.reciprocal(1.0 + jnp.exp(-z3), approx=True)


def _batch_tiling(n):
    # ~512-row f32 tiles (near HBM roofline per measured sweeps); always at
    # least 2 batch tiles so ("parallel",) can shard across v7x's two TCs.
    tile_n = min(512, _round_up(max(pl.cdiv(n, 2), 1), SUBLANE))
    padded_n = max(_round_up(n, tile_n), 2 * tile_n)
    return tile_n, padded_n


def _pad2(a, rows, cols):
    return jnp.pad(a, ((0, rows - a.shape[0]), (0, cols - a.shape[1])))


def vnet_forward(x, params, *, tile_n=None):
    """Fused VNet forward pass.

    x: (N, in_dim) float32
    params: dict with w1 (in,h), b1 (1,h), w2 (h,h), b2 (1,h), w3 (h,out), b3 (1,out)
    Returns (N, out_dim) float32.
    """
    w1, b1, w2, b2, w3, b3 = (
        params["w1"], params["b1"], params["w2"],
        params["b2"], params["w3"], params["b3"],
    )
    n, in_dim = x.shape
    h_dim = w1.shape[1]
    out_dim = w3.shape[1]

    # Lane-dense padded feature dims.
    in_p = _round_up(in_dim, LANE)
    h_p = _round_up(h_dim, LANE)
    out_p = _round_up(out_dim, LANE)

    auto_tile, padded_n = _batch_tiling(n)
    if tile_n is None:
        tile_n = auto_tile
    else:
        tile_n = _round_up(tile_n, SUBLANE)
        padded_n = max(_round_up(n, tile_n), 2 * tile_n)
    grid = (padded_n // tile_n,)

    # Zero padding is exact: padded x columns hit zero weight rows, padded
    # hidden units get 0 pre-activation -> tanh(0)=0 -> no downstream effect.
    xp = _pad2(x.astype(jnp.float32), padded_n, in_p)
    w1p = _pad2(w1, in_p, h_p).astype(jnp.bfloat16)
    w2p = _pad2(w2, h_p, h_p).astype(jnp.bfloat16)
    w3p = _pad2(w3, h_p, out_p).astype(jnp.bfloat16)
    b1p = _pad2(b1, 1, h_p).astype(jnp.float32)
    b2p = _pad2(b2, 1, h_p).astype(jnp.float32)
    b3p = _pad2(b3, 1, out_p).astype(jnp.float32)

    in_specs = [
        pl.BlockSpec((tile_n, in_p), lambda i: (i, 0)),   # x: tiled over batch
        pl.BlockSpec((in_p, h_p), lambda i: (0, 0)),      # w1 (resident, constant block)
        pl.BlockSpec((1, h_p), lambda i: (0, 0)),         # b1
        pl.BlockSpec((h_p, h_p), lambda i: (0, 0)),       # w2
        pl.BlockSpec((1, h_p), lambda i: (0, 0)),         # b2
        pl.BlockSpec((h_p, out_p), lambda i: (0, 0)),     # w3
        pl.BlockSpec((1, out_p), lambda i: (0, 0)),       # b3
    ]
    out_specs = pl.BlockSpec((tile_n, out_p), lambda i: (i, 0))

    # VMEM budget: double-buffered f32 x/out tiles + double-buffered bf16 weights.
    vmem_need = 2 * tile_n * (in_p + out_p) * 4
    vmem_need += 2 * (in_p * h_p + h_p * h_p + h_p * out_p) * 2
    vmem_need += 2 * (2 * h_p + out_p) * 4
    vmem_limit = int(min(max(4 * vmem_need, 16 << 20), 48 << 20))  # 48 MiB cap: fits v7x's 64 MiB

    cost = pl.CostEstimate(
        flops=2 * padded_n * (in_p * h_p + h_p * h_p + h_p * out_p),
        transcendentals=padded_n * (2 * h_p + out_p),
        bytes_accessed=(
            padded_n * in_p * 4
            + (in_p * h_p + h_p * h_p + h_p * out_p) * 2
            + (2 * h_p + out_p) * 4
            + padded_n * out_p * 4
        ),
    )

    out_padded = pl.pallas_call(
        vnet_kernel,
        out_shape=jax.ShapeDtypeStruct((padded_n, out_p), jnp.float32),
        grid_spec=pl.GridSpec(
            grid=grid,
            in_specs=in_specs,
            out_specs=out_specs,
        ),
        compiler_params=pltpu.CompilerParams(
            dimension_semantics=("parallel",),
            vmem_limit_bytes=vmem_limit,
        ),
        cost_estimate=cost,
    )(xp, w1p, b1p, w2p, b2p, w3p, b3p)

    return out_padded[:n, :out_dim]


def init_vnet_params(key, in_dim, h_dim, out_dim):
    """Deterministic init mirroring PyTorch nn.Linear defaults:
    weights & biases ~ U(-1/sqrt(fan_in), 1/sqrt(fan_in)). Weights are stored
    (fan_in, fan_out), i.e. transposed vs. PyTorch, so the kernel does x @ W + b."""
    keys = jax.random.split(key, 6)

    def linear(kw, kb, fan_in, fan_out):
        bound = 1.0 / math.sqrt(fan_in)
        w = jax.random.uniform(kw, (fan_in, fan_out), jnp.float32, -bound, bound)
        b = jax.random.uniform(kb, (1, fan_out), jnp.float32, -bound, bound)
        return w, b

    w1, b1 = linear(keys[0], keys[1], in_dim, h_dim)
    w2, b2 = linear(keys[2], keys[3], h_dim, h_dim)
    w3, b3 = linear(keys[4], keys[5], h_dim, out_dim)
    return {"w1": w1, "b1": b1, "w2": w2, "b2": b2, "w3": w3, "b3": b3}


def vnet_reference(x, p):
    """Pure-JAX f32 reference for correctness checking."""
    h1 = jnp.tanh(x @ p["w1"] + p["b1"])
    h2 = jnp.tanh(h1 @ p["w2"] + p["b2"])
    z = h2 @ p["w3"] + p["b3"]
    return jax.nn.sigmoid(z)


if __name__ == "__main__":
    # Small shapes consistent with VNet(in_dim, h_dim, out_dim).
    N, IN_DIM, H_DIM, OUT_DIM = 8, 4, 32, 2

    key = jax.random.PRNGKey(0)
    k_x, k_p, k_x2 = jax.random.split(key, 3)

    x = jax.random.normal(k_x, (N, IN_DIM), dtype=jnp.float32)
    params = init_vnet_params(k_p, IN_DIM, H_DIM, OUT_DIM)

    out = jax.block_until_ready(vnet_forward(x, params))
    ref = vnet_reference(x, params)
    assert out.shape == (N, OUT_DIM)
    # bf16 matmul operands + approx reciprocal -> loosen tolerance vs f32 reference.
    assert jnp.allclose(out, ref, atol=2e-2, rtol=2e-2), float(jnp.max(jnp.abs(out - ref)))

    # Ragged batch (not a tile multiple) exercises wrapper-side batch padding.
    x2 = jax.random.normal(k_x2, (20, IN_DIM), dtype=jnp.float32)
    out2 = jax.block_until_ready(vnet_forward(x2, params))
    ref2 = vnet_reference(x2, params)
    assert out2.shape == (20, OUT_DIM)
    assert jnp.allclose(out2, ref2, atol=2e-2, rtol=2e-2), float(jnp.max(jnp.abs(out2 - ref2)))

    print("KERNEL_OK")
</pallas_src>

<mosaic_0001>
module attributes {stable_mosaic.version = 11 : i64} {
  func.func @vnet_kernel(%arg0: i32, %arg1: memref<8x128xf32, #tpu.memory_space<vmem>>, %arg2: memref<128x128xbf16, #tpu.memory_space<vmem>>, %arg3: memref<1x128xf32, #tpu.memory_space<vmem>>, %arg4: memref<128x128xbf16, #tpu.memory_space<vmem>>, %arg5: memref<1x128xf32, #tpu.memory_space<vmem>>, %arg6: memref<128x128xbf16, #tpu.memory_space<vmem>>, %arg7: memref<1x128xf32, #tpu.memory_space<vmem>>, %arg8: memref<8x128xf32, #tpu.memory_space<vmem>>) attributes {dimension_semantics = [#tpu.dimension_semantics<parallel>], iteration_bounds = array<i64: 2>, scalar_prefetch = 0 : i64, scratch_operands = 0 : i64, tpu.core_type = #tpu.core_type<tc>, window_params = [{transform_indices = @transform_0, window_bounds = array<i64: 8, 128>}, {pipeline_mode = #tpu.pipeline_mode<synchronous>, transform_indices = @transform_1, window_bounds = array<i64: 128, 128>}, {pipeline_mode = #tpu.pipeline_mode<synchronous>, transform_indices = @transform_2, window_bounds = array<i64: 1, 128>}, {pipeline_mode = #tpu.pipeline_mode<synchronous>, transform_indices = @transform_3, window_bounds = array<i64: 128, 128>}, {pipeline_mode = #tpu.pipeline_mode<synchronous>, transform_indices = @transform_4, window_bounds = array<i64: 1, 128>}, {pipeline_mode = #tpu.pipeline_mode<synchronous>, transform_indices = @transform_5, window_bounds = array<i64: 128, 128>}, {pipeline_mode = #tpu.pipeline_mode<synchronous>, transform_indices = @transform_6, window_bounds = array<i64: 1, 128>}, {transform_indices = @transform_7, window_bounds = array<i64: 8, 128>}]} {
    %c0 = arith.constant 0 : index
    %c0_0 = arith.constant 0 : index
    %0 = vector.load %arg1[%c0, %c0_0] : memref<8x128xf32, #tpu.memory_space<vmem>>, vector<8x128xf32>
    %1 = arith.truncf %0 : vector<8x128xf32> to vector<8x128xbf16>
    %c0_1 = arith.constant 0 : index
    %c0_2 = arith.constant 0 : index
    %2 = vector.load %arg2[%c0_1, %c0_2] : memref<128x128xbf16, #tpu.memory_space<vmem>>, vector<128x128xbf16>
    %cst = arith.constant dense<0.000000e+00> : vector<8x128xf32>
    %3 = tpu.matmul %1, %2, %cst {dimension_numbers = #tpu.dot_dimension_numbers<[1], [0], [0], [1], [0, 0, 1, 1], [], []>} : vector<8x128xbf16>, vector<128x128xbf16>, vector<8x128xf32> -> vector<8x128xf32>
    %c0_3 = arith.constant 0 : index
    %c0_4 = arith.constant 0 : index
    %4 = vector.load %arg3[%c0_3, %c0_4] : memref<1x128xf32, #tpu.memory_space<vmem>>, vector<1x128xf32>
    %5 = vector.broadcast %4 : vector<1x128xf32> to vector<8x128xf32>
    %6 = arith.addf %3, %5 : vector<8x128xf32>
    %7 = math.tanh %6 : vector<8x128xf32>
    %8 = arith.truncf %7 : vector<8x128xf32> to vector<8x128xbf16>
    %c0_5 = arith.constant 0 : index
    %c0_6 = arith.constant 0 : index
    %9 = vector.load %arg4[%c0_5, %c0_6] : memref<128x128xbf16, #tpu.memory_space<vmem>>, vector<128x128xbf16>
    %cst_7 = arith.constant dense<0.000000e+00> : vector<8x128xf32>
    %10 = tpu.matmul %8, %9, %cst_7 {dimension_numbers = #tpu.dot_dimension_numbers<[1], [0], [0], [1], [0, 0, 1, 1], [], []>} : vector<8x128xbf16>, vector<128x128xbf16>, vector<8x128xf32> -> vector<8x128xf32>
    %c0_8 = arith.constant 0 : index
    %c0_9 = arith.constant 0 : index
    %11 = vector.load %arg5[%c0_8, %c0_9] : memref<1x128xf32, #tpu.memory_space<vmem>>, vector<1x128xf32>
    %12 = vector.broadcast %11 : vector<1x128xf32> to vector<8x128xf32>
    %13 = arith.addf %10, %12 : vector<8x128xf32>
    %14 = math.tanh %13 : vector<8x128xf32>
    %15 = arith.truncf %14 : vector<8x128xf32> to vector<8x128xbf16>
    %c0_10 = arith.constant 0 : index
    %c0_11 = arith.constant 0 : index
    %16 = vector.load %arg6[%c0_10, %c0_11] : memref<128x128xbf16, #tpu.memory_space<vmem>>, vector<128x128xbf16>
    %cst_12 = arith.constant dense<0.000000e+00> : vector<8x128xf32>
    %17 = tpu.matmul %15, %16, %cst_12 {dimension_numbers = #tpu.dot_dimension_numbers<[1], [0], [0], [1], [0, 0, 1, 1], [], []>} : vector<8x128xbf16>, vector<128x128xbf16>, vector<8x128xf32> -> vector<8x128xf32>
    %c0_13 = arith.constant 0 : index
    %c0_14 = arith.constant 0 : index
    %18 = vector.load %arg7[%c0_13, %c0_14] : memref<1x128xf32, #tpu.memory_space<vmem>>, vector<1x128xf32>
    %19 = vector.broadcast %18 : vector<1x128xf32> to vector<8x128xf32>
    %20 = arith.addf %17, %19 : vector<8x128xf32>
    %cst_15 = arith.constant 0.000000e+00 : f32
    %21 = vector.broadcast %cst_15 : f32 to vector<8x128xf32>
    %22 = arith.subf %21, %20 : vector<8x128xf32>
    %23 = math.exp %22 : vector<8x128xf32>
    %cst_16 = arith.constant 1.000000e+00 : f32
    %24 = vector.broadcast %cst_16 : f32 to vector<8x128xf32>
    %25 = arith.addf %24, %23 : vector<8x128xf32>
    %26 = tpu.reciprocal %25 {approx = true} : vector<8x128xf32> -> vector<8x128xf32>
    %c0_17 = arith.constant 0 : index
    %c0_18 = arith.constant 0 : index
    %27 = vector.load %arg8[%c0_17, %c0_18] : memref<8x128xf32, #tpu.memory_space<vmem>>, vector<8x128xf32>
    tpu.vector_store %arg8[%c0_17, %c0_18], %26 {strides = array<i32>} : memref<8x128xf32, #tpu.memory_space<vmem>>, vector<8x128xf32>,
    return
  }
  func.func @transform_0(%arg0: i32) -> (i32, i32) {
    %c0_i32 = arith.constant 0 : i32
    %c0_i32_0 = arith.constant 0 : i32
    return %arg0, %c0_i32 : i32, i32
  }
  func.func @transform_1(%arg0: i32) -> (i32, i32) {
    %c0_i32 = arith.constant 0 : i32
    %c0_i32_0 = arith.constant 0 : i32
    %c0_i32_1 = arith.constant 0 : i32
    return %c0_i32, %c0_i32_0 : i32, i32
  }
  func.func @transform_2(%arg0: i32) -> (i32, i32) {
    %c0_i32 = arith.constant 0 : i32
    %c0_i32_0 = arith.constant 0 : i32
    %c0_i32_1 = arith.constant 0 : i32
    return %c0_i32, %c0_i32_0 : i32, i32
  }
  func.func @transform_3(%arg0: i32) -> (i32, i32) {
    %c0_i32 = arith.constant 0 : i32
    %c0_i32_0 = arith.constant 0 : i32
    %c0_i32_1 = arith.constant 0 : i32
    return %c0_i32, %c0_i32_0 : i32, i32
  }
  func.func @transform_4(%arg0: i32) -> (i32, i32) {
    %c0_i32 = arith.constant 0 : i32
    %c0_i32_0 = arith.constant 0 : i32
    %c0_i32_1 = arith.constant 0 : i32
    return %c0_i32, %c0_i32_0 : i32, i32
  }
  func.func @transform_5(%arg0: i32) -> (i32, i32) {
    %c0_i32 = arith.constant 0 : i32
    %c0_i32_0 = arith.constant 0 : i32
    %c0_i32_1 = arith.constant 0 : i32
    return %c0_i32, %c0_i32_0 : i32, i32
  }
  func.func @transform_6(%arg0: i32) -> (i32, i32) {
    %c0_i32 = arith.constant 0 : i32
    %c0_i32_0 = arith.constant 0 : i32
    %c0_i32_1 = arith.constant 0 : i32
    return %c0_i32, %c0_i32_0 : i32, i32
  }
  func.func @transform_7(%arg0: i32) -> (i32, i32) {
    %c0_i32 = arith.constant 0 : i32
    %c0_i32_0 = arith.constant 0 : i32
    return %arg0, %c0_i32 : i32, i32
  }
}

</mosaic_0001>

<llo_original>
// kernel: tpu_custom_call.1
$region0: #{tpu_custom_call.1}
  #allocation0 [shape = 'u32[]', space=smem, size = 0x4, offset = 0x4, fixed_abs, tag = 'smem constant byte address 0x4 - core index']
  #allocation1 [shape = 'u32[72,128]{1,0:T(1,128)}', space=vmem, size = 0x9000, scoped, tag = 'internal scratch']
  %s0 = inlined_call_operand.hbm [shape: f32[16,128], index: 0, kind: input, shape index: {}]
  %s1 = inlined_call_operand.hbm [shape: bf16[128,128], index: 1, kind: input, shape index: {}]
  %s2 = inlined_call_operand.vmem [shape: f32[1,128], index: 2, kind: input, shape index: {}]
  %s3 = inlined_call_operand.hbm [shape: bf16[128,128], index: 3, kind: input, shape index: {}]
  %s4 = inlined_call_operand.vmem [shape: f32[1,128], index: 4, kind: input, shape index: {}]
  %s5 = inlined_call_operand.hbm [shape: bf16[128,128], index: 5, kind: input, shape index: {}]
  %s6 = inlined_call_operand.vmem [shape: f32[1,128], index: 6, kind: input, shape index: {}]
  %s7 = inlined_call_operand.hbm [shape: f32[16,128], index: 7, kind: output, shape index: {}]
  %s8 = sld [smem:[#allocation0]]
  $region77: #{tpu_custom_call.1} parent=0
    _
  %s10 = ssub.s32 1, %s8
  %s11 = scalar_select 0, %s10, %s8
  $region1: #{tpu_custom_call.1} parent=0
    #allocation2 [shape = 'u8[8192]{0}', space=vmem, size = 0x2000, scoped, tag = 'input window, operand 0']
    #allocation3 [shape = 's32[2]{0}', space=sflag, size = 0x8, scoped, tag = 'scoped memory for tpu_custom_call.1']
    #allocation4 [shape = 's32[2]{0}', space=sflag, size = 0x8, scoped, tag = 'scoped memory for tpu_custom_call.1']
    #allocation5 [shape = 'u8[32768]{0}', space=vmem, size = 0x8000, scoped, tag = 'input window, operand 1, single buffered']
    #allocation6 [shape = 's32[1]{0}', space=sflag, size = 0x4, scoped, tag = 'scoped memory for tpu_custom_call.1']
    #allocation7 [shape = 'u8[32768]{0}', space=vmem, size = 0x8000, scoped, tag = 'input window, operand 3, single buffered']
    #allocation8 [shape = 'u8[32768]{0}', space=vmem, size = 0x8000, scoped, tag = 'input window, operand 5, single buffered']
    #allocation9 [shape = 's32[1]{0}', space=sflag, size = 0x4, scoped, tag = 'scoped memory for tpu_custom_call.1']
    #allocation10 [shape = 'u8[8192]{0}', space=vmem, size = 0x2000, scoped, tag = 'output window, operand 0']
    %12 = vsyncpa [#allocation3], 0
    %s13 = scalar_lea.sflag [#allocation3], 1
    %14 = vsyncpa %s13, 0
    %15 = vsyncpa [#allocation6], 0
    %16 = vsyncpa [#allocation9], 0
    %17 = vsyncpa [#allocation4], 0
    %s18 = scalar_lea.sflag [#allocation4], 1
    %19 = vsyncpa %s18, 0
    loop: start=0, step=1, limit=4
    $region2: #{tpu_custom_call.1} parent=1 // loop_pre_header
      _
    $region3: #{tpu_custom_call.1} parent=1 // loop_header
      %s21 = sphi 0, %s25
      %p22 = scmp.ge.s32.totalorder %s21, 4
      %s31 = sphi 0, %s33
      %s34 = sphi 0, %s31
      %s35 = sphi 0, %s34
      %s51 = sphi 0, %s35
      %s55 = sphi 0, %s55
      %s57 = sphi 0, %s55
      %s58 = sphi 0, %s57
      %s72 = sphi 0, %s58
      %s76 = sphi 0, %s76
      %s78 = sphi 0, %s76
      %s79 = sphi 0, %s78
      %s93 = sphi 0, %s79
      %s97 = sphi 0, %s97
      %s99 = sphi 0, %s97
      %s100 = sphi 0, %s99
      %s114 = sphi 0, %s100
      %s118 = sphi 0, %s118
      %s120 = sphi 0, %s118
      %s121 = sphi 0, %s120
      %s135 = sphi 0, %s121
      %s139 = sphi 0, %s139
      %s141 = sphi 0, %s139
      %s142 = sphi 0, %s141
      %s156 = sphi 0, %s142
      %s160 = sphi 0, %s160
      %s162 = sphi 0, %s160
      %s163 = sphi 0, %s162
      %s177 = sphi 0, %s163
      %s183 = sphi 0, %s185
      %s186 = sphi 0, %s183
      %s187 = sphi 0, %s186
      %s203 = sphi 0, %s187
    $region4: #{tpu_custom_call.1} parent=1 // loop_header_branch
      %24 = sbr.rel (%p22) target = $region8
    $region5: #{tpu_custom_call.1} parent=1 // loop_body
      %s26 = ssub.s32 %s21, 1
      %s27 = ssub.s32 %s21, 2
      %s28 = sadd.s32 %s21, 1
      %s29 = ssub.s32 %s21, %s28
      %p30 = scmp.eq.s32.totalorder %s29, 0
      %s32 = sadd.s32 %s31, 1
      %s33 = scalar_select %p30, %s31, %s32
      %p36 = pneg %p30
      %p37 = scmp.eq.s32.totalorder %s21, 1
      %p38 = por %p36, %p37
      %p39 = scmp.ne.s32.totalorder %s31, %s34
      %p40 = scmp.eq.s32.totalorder %s21, 0
      %p41 = por %p39, %p40
      %p42 = scmp.ne.s32.totalorder %s31, %s34
      %p43 = scmp.eq.s32.totalorder %s26, 1
      %p44 = por %p42, %p43
      %p45 = scmp.ne.s32.totalorder %s34, %s35
      %p46 = scmp.eq.s32.totalorder %s26, 0
      %p47 = por %p45, %p46
      %p48 = scmp.ne.s32.totalorder %s34, %s35
      %p49 = scmp.eq.s32.totalorder %s27, 1
      %p50 = por %p48, %p49
      %p52 = scmp.ne.s32.totalorder %s35, %s51
      %p53 = scmp.eq.s32.totalorder %s27, 0
      %p54 = por %p52, %p53
      %s56 = sadd.s32 %s55, 1
      %p59 = scmp.eq.s32.totalorder %s21, 1
      %p60 = scmp.ne.s32.totalorder %s55, %s57
      %p61 = scmp.eq.s32.totalorder %s21, 0
      %p62 = por %p60, %p61
      %p63 = scmp.ne.s32.totalorder %s55, %s57
      %p64 = scmp.eq.s32.totalorder %s26, 1
      %p65 = por %p63, %p64
      %p66 = scmp.ne.s32.totalorder %s57, %s58
      %p67 = scmp.eq.s32.totalorder %s26, 0
      %p68 = por %p66, %p67
      %p69 = scmp.ne.s32.totalorder %s57, %s58
      %p70 = scmp.eq.s32.totalorder %s27, 1
      %p71 = por %p69, %p70
      %p73 = scmp.ne.s32.totalorder %s58, %s72
      %p74 = scmp.eq.s32.totalorder %s27, 0
      %p75 = por %p73, %p74
      %s77 = sadd.s32 %s76, 1
      %p80 = scmp.eq.s32.totalorder %s21, 1
      %p81 = scmp.ne.s32.totalorder %s76, %s78
      %p82 = scmp.eq.s32.totalorder %s21, 0
      %p83 = por %p81, %p82
      %p84 = scmp.ne.s32.totalorder %s76, %s78
      %p85 = scmp.eq.s32.totalorder %s26, 1
      %p86 = por %p84, %p85
      %p87 = scmp.ne.s32.totalorder %s78, %s79
      %p88 = scmp.eq.s32.totalorder %s26, 0
      %p89 = por %p87, %p88
      %p90 = scmp.ne.s32.totalorder %s78, %s79
      %p91 = scmp.eq.s32.totalorder %s27, 1
      %p92 = por %p90, %p91
      %p94 = scmp.ne.s32.totalorder %s79, %s93
      %p95 = scmp.eq.s32.totalorder %s27, 0
      %p96 = por %p94, %p95
      %s98 = sadd.s32 %s97, 1
      %p101 = scmp.eq.s32.totalorder %s21, 1
      %p102 = scmp.ne.s32.totalorder %s97, %s99
      %p103 = scmp.eq.s32.totalorder %s21, 0
      %p104 = por %p102, %p103
      %p105 = scmp.ne.s32.totalorder %s97, %s99
      %p106 = scmp.eq.s32.totalorder %s26, 1
      %p107 = por %p105, %p106
      %p108 = scmp.ne.s32.totalorder %s99, %s100
      %p109 = scmp.eq.s32.totalorder %s26, 0
      %p110 = por %p108, %p109
      %p111 = scmp.ne.s32.totalorder %s99, %s100
      %p112 = scmp.eq.s32.totalorder %s27, 1
      %p113 = por %p111, %p112
      %p115 = scmp.ne.s32.totalorder %s100, %s114
      %p116 = scmp.eq.s32.totalorder %s27, 0
      %p117 = por %p115, %p116
      %s119 = sadd.s32 %s118, 1
      %p122 = scmp.eq.s32.totalorder %s21, 1
      %p123 = scmp.ne.s32.totalorder %s118, %s120
      %p124 = scmp.eq.s32.totalorder %s21, 0
      %p125 = por %p123, %p124
      %p126 = scmp.ne.s32.totalorder %s118, %s120
      %p127 = scmp.eq.s32.totalorder %s26, 1
      %p128 = por %p126, %p127
      %p129 = scmp.ne.s32.totalorder %s120, %s121
      %p130 = scmp.eq.s32.totalorder %s26, 0
      %p131 = por %p129, %p130
      %p132 = scmp.ne.s32.totalorder %s120, %s121
      %p133 = scmp.eq.s32.totalorder %s27, 1
      %p134 = por %p132, %p133
      %p136 = scmp.ne.s32.totalorder %s121, %s135
      %p137 = scmp.eq.s32.totalorder %s27, 0
      %p138 = por %p136, %p137
      %s140 = sadd.s32 %s139, 1
      %p143 = scmp.eq.s32.totalorder %s21, 1
      %p144 = scmp.ne.s32.totalorder %s139, %s141
      %p145 = scmp.eq.s32.totalorder %s21, 0
      %p146 = por %p144, %p145
      %p147 = scmp.ne.s32.totalorder %s139, %s141
      %p148 = scmp.eq.s32.totalorder %s26, 1
      %p149 = por %p147, %p148
      %p150 = scmp.ne.s32.totalorder %s141, %s142
      %p151 = scmp.eq.s32.totalorder %s26, 0
      %p152 = por %p150, %p151
      %p153 = scmp.ne.s32.totalorder %s141, %s142
      %p154 = scmp.eq.s32.totalorder %s27, 1
      %p155 = por %p153, %p154
      %p157 = scmp.ne.s32.totalorder %s142, %s156
      %p158 = scmp.eq.s32.totalorder %s27, 0
      %p159 = por %p157, %p158
      %s161 = sadd.s32 %s160, 1
      %p164 = scmp.eq.s32.totalorder %s21, 1
      %p165 = scmp.ne.s32.totalorder %s160, %s162
      %p166 = scmp.eq.s32.totalorder %s21, 0
      %p167 = por %p165, %p166
      %p168 = scmp.ne.s32.totalorder %s160, %s162
      %p169 = scmp.eq.s32.totalorder %s26, 1
      %p170 = por %p168, %p169
      %p171 = scmp.ne.s32.totalorder %s162, %s163
      %p172 = scmp.eq.s32.totalorder %s26, 0
      %p173 = por %p171, %p172
      %p174 = scmp.ne.s32.totalorder %s162, %s163
      %p175 = scmp.eq.s32.totalorder %s27, 1
      %p176 = por %p174, %p175
      %p178 = scmp.ne.s32.totalorder %s163, %s177
      %p179 = scmp.eq.s32.totalorder %s27, 0
      %p180 = por %p178, %p179
      %s181 = ssub.s32 %s21, %s28
      %p182 = scmp.eq.s32.totalorder %s181, 0
      %s184 = sadd.s32 %s183, 1
      %s185 = scalar_select %p182, %s183, %s184
      %p188 = pneg %p182
      %p189 = scmp.eq.s32.totalorder %s21, 1
      %p190 = por %p188, %p189
      %p191 = scmp.ne.s32.totalorder %s183, %s186
      %p192 = scmp.eq.s32.totalorder %s21, 0
      %p193 = por %p191, %p192
      %p194 = scmp.ne.s32.totalorder %s183, %s186
      %p195 = scmp.eq.s32.totalorder %s26, 1
      %p196 = por %p194, %p195
      %p197 = scmp.ne.s32.totalorder %s186, %s187
      %p198 = scmp.eq.s32.totalorder %s26, 0
      %p199 = por %p197, %p198
      %p200 = scmp.ne.s32.totalorder %s186, %s187
      %p201 = scmp.eq.s32.totalorder %s27, 1
      %p202 = por %p200, %p201
      %p204 = scmp.ne.s32.totalorder %s187, %s203
      %p205 = scmp.eq.s32.totalorder %s27, 0
      %p206 = por %p204, %p205
      %p207 = scmp.le.s32.totalorder 1, %s21
      %p208 = scmp.lt.s32.totalorder %s21, 3
      %p209 = pnand %p207, %p208
      %p210 = pneg %p209
      // Predicated region
      $region9: #{tpu_custom_call.1} parent=5 // pred_check
        _
      $region10: #{tpu_custom_call.1} parent=5 // pred_check_branch
        %212 = sbr.rel (%p209) target = $region12
      $region11: #{tpu_custom_call.1} parent=5 // pred_region
        %s213 = ssub.s32 %s21, 1
        // Predicated region
        $region13: #{tpu_custom_call.1} parent=11 // pred_check
          %p214 = pneg %p68
        $region14: #{tpu_custom_call.1} parent=11 // pred_check_branch
          %216 = sbr.rel (%p214) target = $region16
        $region15: #{tpu_custom_call.1} parent=11 // pred_region
          %218 = vsyncadd [#allocation6], 0
          %s219 = sshll.u32 %s1, 4
          %s220 = int_to_ptr.hbm [resolvable:$true] %s219
          %s221 = sshll.u32 [#allocation5], 4
          %s222 = int_to_ptr.vmem [resolvable:$true] %s221
          %227 = dma.hbm_to_vmem [thread:$0]  %s220, 1024, %s222, [#allocation6], 64, 64, 4
        $region16: #{tpu_custom_call.1} parent=11 // pred_fallthru
          _
        // Predicated region
        $region17: #{tpu_custom_call.1} parent=11 // pred_check
          %p228 = pneg %p89
        $region18: #{tpu_custom_call.1} parent=11 // pred_check_branch
          %230 = sbr.rel (%p228) target = $region20
        $region19: #{tpu_custom_call.1} parent=11 // pred_region
          _
        $region20: #{tpu_custom_call.1} parent=11 // pred_fallthru
          _
        // Predicated region
        $region21: #{tpu_custom_call.1} parent=11 // pred_check
          %p231 = pneg %p110
        $region22: #{tpu_custom_call.1} parent=11 // pred_check_branch
          %233 = sbr.rel (%p231) target = $region24
        $region23: #{tpu_custom_call.1} parent=11 // pred_region
          %235 = vsyncadd [#allocation6], 0
          %s236 = sshll.u32 %s3, 4
          %s237 = int_to_ptr.hbm [resolvable:$true] %s236
          %s238 = sshll.u32 [#allocation7], 4
          %s239 = int_to_ptr.vmem [resolvable:$true] %s238
          %244 = dma.hbm_to_vmem [thread:$0]  %s237, 1024, %s239, [#allocation6], 64, 64, 4
        $region24: #{tpu_custom_call.1} parent=11 // pred_fallthru
          _
        // Predicated region
        $region25: #{tpu_custom_call.1} parent=11 // pred_check
          %p245 = pneg %p131
        $region26: #{tpu_custom_call.1} parent=11 // pred_check_branch
          %247 = sbr.rel (%p245) target = $region28
        $region27: #{tpu_custom_call.1} parent=11 // pred_region
          _
        $region28: #{tpu_custom_call.1} parent=11 // pred_fallthru
          _
        // Predicated region
        $region29: #{tpu_custom_call.1} parent=11 // pred_check
          %p248 = pneg %p152
        $region30: #{tpu_custom_call.1} parent=11 // pred_check_branch
          %250 = sbr.rel (%p248) target = $region32
        $region31: #{tpu_custom_call.1} parent=11 // pred_region
          %252 = vsyncadd [#allocation9], 0
          %s253 = sshll.u32 %s5, 4
          %s254 = int_to_ptr.hbm [resolvable:$true] %s253
          %s255 = sshll.u32 [#allocation8], 4
          %s256 = int_to_ptr.vmem [resolvable:$true] %s255
          %261 = dma.hbm_to_vmem [thread:$0]  %s254, 1024, %s256, [#allocation9], 64, 64, 4
        $region32: #{tpu_custom_call.1} parent=11 // pred_fallthru
          _
        // Predicated region
        $region33: #{tpu_custom_call.1} parent=11 // pred_check
          %p262 = pneg %p173
        $region34: #{tpu_custom_call.1} parent=11 // pred_check_branch
          %264 = sbr.rel (%p262) target = $region36
        $region35: #{tpu_custom_call.1} parent=11 // pred_region
          _
        $region36: #{tpu_custom_call.1} parent=11 // pred_fallthru
          _
      $region12: #{tpu_custom_call.1} parent=5 // pred_fallthru
        _
      %p265 = scmp.lt.s32.totalorder %s21, 2
      // Predicated region
      $region37: #{tpu_custom_call.1} parent=5 // pred_check
        %p266 = pneg %p265
      $region38: #{tpu_custom_call.1} parent=5 // pred_check_branch
        %268 = sbr.rel (%p266) target = $region40
      $region39: #{tpu_custom_call.1} parent=5 // pred_region
        // Predicated region
        $region41: #{tpu_custom_call.1} parent=39 // pred_check
          %p269 = pneg %p41
        $region42: #{tpu_custom_call.1} parent=39 // pred_check_branch
          %271 = sbr.rel (%p269) target = $region44
        $region43: #{tpu_custom_call.1} parent=39 // pred_region
          %s272 = sand.u32 %s31, 1
          %s273 = scalar_lea.sflag [#allocation3], %s272
          %s274 = sand.u32 %s31, 1
          %s275 = smul.addr %s274, 8
          %s276 = scalar_lea.vmem [#allocation2], %s275
          %278 = vsyncadd %s273, 0
          %s279 = smul.addr %s21, 8
          %s280 = scalar_lea.hbm %s0, %s279
          %s282 = sshll.u32 %s280, 4
          %s283 = int_to_ptr.hbm [resolvable:$true] %s282
          %s284 = sshll.u32 %s276, 4
          %s285 = int_to_ptr.vmem [resolvable:$true] %s284
          %287 = dma.hbm_to_vmem [thread:$0]  %s283, 128, %s285, %s273
        $region44: #{tpu_custom_call.1} parent=39 // pred_fallthru
          _
      $region40: #{tpu_custom_call.1} parent=5 // pred_fallthru
        _
      %p288 = scmp.le.s32.totalorder 1, %s21
      %p289 = scmp.lt.s32.totalorder %s21, 3
      %p290 = pnand %p288, %p289
      %p291 = pneg %p290
      // Predicated region
      $region45: #{tpu_custom_call.1} parent=5 // pred_check
        _
      $region46: #{tpu_custom_call.1} parent=5 // pred_check_branch
        %293 = sbr.rel (%p290) target = $region48
      $region47: #{tpu_custom_call.1} parent=5 // pred_region
        %s294 = ssub.s32 %s21, 1
        %s295 = sand.u32 %s34, 1
        %s296 = scalar_lea.sflag [#allocation3], %s295
        %s297 = sand.u32 %s34, 1
        %s298 = smul.addr %s297, 8
        %s299 = scalar_lea.vmem [#allocation2], %s298
        // Predicated region
        $region49: #{tpu_custom_call.1} parent=47 // pred_check
          %p300 = pneg %p47
        $region50: #{tpu_custom_call.1} parent=47 // pred_check_branch
          %302 = sbr.rel (%p300) target = $region52
        $region51: #{tpu_custom_call.1} parent=47 // pred_region
          %304 = dma.done %s296, 128
        $region52: #{tpu_custom_call.1} parent=47 // pred_fallthru
          _
        // Predicated region
        $region53: #{tpu_custom_call.1} parent=47 // pred_check
          %p305 = pneg %p68
        $region54: #{tpu_custom_call.1} parent=47 // pred_check_branch
          %307 = sbr.rel (%p305) target = $region56
        $region55: #{tpu_custom_call.1} parent=47 // pred_region
          %309 = dma.done [#allocation6], 1024
        $region56: #{tpu_custom_call.1} parent=47 // pred_fallthru
          _
        // Predicated region
        $region57: #{tpu_custom_call.1} parent=47 // pred_check
          %p310 = pneg %p110
        $region58: #{tpu_custom_call.1} parent=47 // pred_check_branch
          %312 = sbr.rel (%p310) target = $region60
        $region59: #{tpu_custom_call.1} parent=47 // pred_region
          %314 = dma.done [#allocation6], 1024
        $region60: #{tpu_custom_call.1} parent=47 // pred_fallthru
          _
        // Predicated region
        $region61: #{tpu_custom_call.1} parent=47 // pred_check
          %p315 = pneg %p152
        $region62: #{tpu_custom_call.1} parent=47 // pred_check_branch
          %317 = sbr.rel (%p315) target = $region64
        $region63: #{tpu_custom_call.1} parent=47 // pred_region
          %319 = dma.done [#allocation9], 1024
        $region64: #{tpu_custom_call.1} parent=47 // pred_fallthru
          _
        %s320 = sand.u32 %s34, 1
        %s321 = scalar_lea.sflag [#allocation3], %s320
        %s322 = sand.u32 %s34, 1
        %s323 = smul.addr %s322, 8
        %s324 = scalar_lea.vmem [#allocation2], %s323
        %p325 = pneg %p47
        %p326 = pneg %p44
        %p327 = pneg %p68
        %p328 = pneg %p65
        %p329 = pneg %p89
        %p330 = pneg %p86
        %p331 = pneg %p110
        %p332 = pneg %p107
        %p333 = pneg %p131
        %p334 = pneg %p128
        %p335 = pneg %p152
        %p336 = pneg %p149
        %p337 = pneg %p173
        %p338 = pneg %p170
        %p339 = pneg %p199
        %p340 = pneg %p196
        %s341 = sand.u32 %s186, 1
        %s342 = scalar_lea.sflag [#allocation4], %s341
        %s343 = sand.u32 %s186, 1
        %s344 = smul.addr %s343, 8
        %s345 = scalar_lea.vmem [#allocation10], %s344
        %v346 = vld [vmem:[%s299] sm:$0xff]
        %v347 = vpack.c.bf16 %v346, %v346
        %v348 = vld [vmem:[#allocation5] sm:$0xf]
        %v349 = vld [vmem:[#allocation5 + $0x4] sm:$0xf]
        %v350 = vld [vmem:[#allocation5 + $0x8] sm:$0xf]
        %v351 = vld [vmem:[#allocation5 + $0xc] sm:$0xf]
        %v352 = vld [vmem:[#allocation5 + $0x10] sm:$0xf]
        %v353 = vld [vmem:[#allocation5 + $0x14] sm:$0xf]
        %v354 = vld [vmem:[#allocation5 + $0x18] sm:$0xf]
        %v355 = vld [vmem:[#allocation5 + $0x1c] sm:$0xf]
        %v356 = vld [vmem:[#allocation5 + $0x20] sm:$0xf]
        %v357 = vld [vmem:[#allocation5 + $0x24] sm:$0xf]
        %v358 = vld [vmem:[#allocation5 + $0x28] sm:$0xf]
        %v359 = vld [vmem:[#allocation5 + $0x2c] sm:$0xf]
        %v360 = vld [vmem:[#allocation5 + $0x30] sm:$0xf]
        %v361 = vld [vmem:[#allocation5 + $0x34] sm:$0xf]
        %v362 = vld [vmem:[#allocation5 + $0x38] sm:$0xf]
        %v363 = vld [vmem:[#allocation5 + $0x3c] sm:$0xf]
        %v364 = vld [vmem:[%s2] sm:$0x1]
        %v366 = vperm.slane %v364, 0
        %v384 = vunpack.c.l.b16 %v348
        %v385 = vunpack.c.l.b16 %v349
        %v386 = vunpack.c.l.b16 %v350
        %v387 = vunpack.c.l.b16 %v351
        %v388 = vunpack.c.l.b16 %v352
        %v389 = vunpack.c.l.b16 %v353
        %v390 = vunpack.c.l.b16 %v354
        %v391 = vunpack.c.l.b16 %v355
        %v392 = vunpack.c.l.b16 %v356
        %v393 = vunpack.c.l.b16 %v357
        %v394 = vunpack.c.l.b16 %v358
        %v395 = vunpack.c.l.b16 %v359
        %v396 = vunpack.c.l.b16 %v360
        %v397 = vunpack.c.l.b16 %v361
        %v398 = vunpack.c.l.b16 %v362
        %v399 = vunpack.c.l.b16 %v363
        %v400 = vpack.c.b16 %v385, %v384
        %v401 = vpack.c.b16 %v387, %v386
        %v402 = vpack.c.b16 %v389, %v388
        %v403 = vpack.c.b16 %v391, %v390
        %v404 = vpack.c.b16 %v393, %v392
        %v405 = vpack.c.b16 %v395, %v394
        %v406 = vpack.c.b16 %v397, %v396
        %v407 = vpack.c.b16 %v399, %v398
        %416 = vmatpush.bf16.msra.mxu0 %v407
        %417 = vmatpush.bf16.msra.mxu0 %v406
        %418 = vmatpush.bf16.msra.mxu0 %v405
        %419 = vmatpush.bf16.msra.mxu0 %v404
        %420 = vmatpush.bf16.msra.mxu0 %v403
        %421 = vmatpush.bf16.msra.mxu0 %v402
        %422 = vmatpush.bf16.msra.mxu0 %v401
        %423 = vmatpush.bf16.msra.mxu0 %v400
        %424 = vmatmul.bf16.gmra.mxu0 %v347
        %v425 = vpop.f32.mrf.mxu0
        %v426 = vadd.f32 %v366, %v425
        %v427 = vpop.f32.mrf.mxu0
        %428 = vdwg.mxu0
        %v429 = vtanh.pop %v426
        %v430 = vpack.c.bf16 %v429, %v429
        %v431 = vld [vmem:[#allocation7] sm:$0xf]
        %v432 = vld [vmem:[#allocation7 + $0x4] sm:$0xf]
        %v433 = vld [vmem:[#allocation7 + $0x8] sm:$0xf]
        %v434 = vld [vmem:[#allocation7 + $0xc] sm:$0xf]
        %v435 = vld [vmem:[#allocation7 + $0x10] sm:$0xf]
        %v436 = vld [vmem:[#allocation7 + $0x14] sm:$0xf]
        %v437 = vld [vmem:[#allocation7 + $0x18] sm:$0xf]
        %v438 = vld [vmem:[#allocation7 + $0x1c] sm:$0xf]
        %v439 = vld [vmem:[#allocation7 + $0x20] sm:$0xf]
        %v440 = vld [vmem:[#allocation7 + $0x24] sm:$0xf]
        %v441 = vld [vmem:[#allocation7 + $0x28] sm:$0xf]
        %v442 = vld [vmem:[#allocation7 + $0x2c] sm:$0xf]
        %v443 = vld [vmem:[#allocation7 + $0x30] sm:$0xf]
        %v444 = vld [vmem:[#allocation7 + $0x34] sm:$0xf]
        %v445 = vld [vmem:[#allocation7 + $0x38] sm:$0xf]
        %v446 = vld [vmem:[#allocation7 + $0x3c] sm:$0xf]
        %v447 = vld [vmem:[%s4] sm:$0x1]
        %v449 = vperm.slane %v447, 0
        %v467 = vunpack.c.l.b16 %v431
        %v468 = vunpack.c.l.b16 %v432
        %v469 = vunpack.c.l.b16 %v433
        %v470 = vunpack.c.l.b16 %v434
        %v471 = vunpack.c.l.b16 %v435
        %v472 = vunpack.c.l.b16 %v436
        %v473 = vunpack.c.l.b16 %v437
        %v474 = vunpack.c.l.b16 %v438
        %v475 = vunpack.c.l.b16 %v439
        %v476 = vunpack.c.l.b16 %v440
        %v477 = vunpack.c.l.b16 %v441
        %v478 = vunpack.c.l.b16 %v442
        %v479 = vunpack.c.l.b16 %v443
        %v480 = vunpack.c.l.b16 %v444
        %v481 = vunpack.c.l.b16 %v445
        %v482 = vunpack.c.l.b16 %v446
        %v483 = vpack.c.b16 %v468, %v467
        %v484 = vpack.c.b16 %v470, %v469
        %v485 = vpack.c.b16 %v472, %v471
        %v486 = vpack.c.b16 %v474, %v473
        %v487 = vpack.c.b16 %v476, %v475
        %v488 = vpack.c.b16 %v478, %v477
        %v489 = vpack.c.b16 %v480, %v479
        %v490 = vpack.c.b16 %v482, %v481
        %499 = vmatpush.bf16.msra.mxu0 %v490
        %500 = vmatpush.bf16.msra.mxu0 %v489
        %501 = vmatpush.bf16.msra.mxu0 %v488
        %502 = vmatpush.bf16.msra.mxu0 %v487
        %503 = vmatpush.bf16.msra.mxu0 %v486
        %504 = vmatpush.bf16.msra.mxu0 %v485
        %505 = vmatpush.bf16.msra.mxu0 %v484
        %506 = vmatpush.bf16.msra.mxu0 %v483
        %507 = vmatmul.bf16.gmra.mxu0 %v430
        %v508 = vpop.f32.mrf.mxu0
        %v509 = vadd.f32 %v449, %v508
        %v510 = vpop.f32.mrf.mxu0
        %511 = vdwg.mxu0
        %v512 = vtanh.pop %v509
        %v513 = vpack.c.bf16 %v512, %v512
        %v514 = vld [vmem:[#allocation8] sm:$0xf]
        %v515 = vld [vmem:[#allocation8 + $0x4] sm:$0xf]
        %v516 = vld [vmem:[#allocation8 + $0x8] sm:$0xf]
        %v517 = vld [vmem:[#allocation8 + $0xc] sm:$0xf]
        %v518 = vld [vmem:[#allocation8 + $0x10] sm:$0xf]
        %v519 = vld [vmem:[#allocation8 + $0x14] sm:$0xf]
        %v520 = vld [vmem:[#allocation8 + $0x18] sm:$0xf]
        %v521 = vld [vmem:[#allocation8 + $0x1c] sm:$0xf]
        %v522 = vld [vmem:[#allocation8 + $0x20] sm:$0xf]
        %v523 = vld [vmem:[#allocation8 + $0x24] sm:$0xf]
        %v524 = vld [vmem:[#allocation8 + $0x28] sm:$0xf]
        %v525 = vld [vmem:[#allocation8 + $0x2c] sm:$0xf]
        %v526 = vld [vmem:[#allocation8 + $0x30] sm:$0xf]
        %v527 = vld [vmem:[#allocation8 + $0x34] sm:$0xf]
        %v528 = vld [vmem:[#allocation8 + $0x38] sm:$0xf]
        %v529 = vld [vmem:[#allocation8 + $0x3c] sm:$0xf]
        %v530 = vld [vmem:[%s6] sm:$0x1]
        %v532 = vperm.slane %v530, 0
        %v550 = vunpack.c.l.b16 %v514
        %v551 = vunpack.c.l.b16 %v515
        %v552 = vunpack.c.l.b16 %v516
        %v553 = vunpack.c.l.b16 %v517
        %v554 = vunpack.c.l.b16 %v518
        %v555 = vunpack.c.l.b16 %v519
        %v556 = vunpack.c.l.b16 %v520
        %v557 = vunpack.c.l.b16 %v521
        %v558 = vunpack.c.l.b16 %v522
        %v559 = vunpack.c.l.b16 %v523
        %v560 = vunpack.c.l.b16 %v524
        %v561 = vunpack.c.l.b16 %v525
        %v562 = vunpack.c.l.b16 %v526
        %v563 = vunpack.c.l.b16 %v527
        %v564 = vunpack.c.l.b16 %v528
        %v565 = vunpack.c.l.b16 %v529
        %v566 = vpack.c.b16 %v551, %v550
        %v567 = vpack.c.b16 %v553, %v552
        %v568 = vpack.c.b16 %v555, %v554
        %v569 = vpack.c.b16 %v557, %v556
        %v570 = vpack.c.b16 %v559, %v558
        %v571 = vpack.c.b16 %v561, %v560
        %v572 = vpack.c.b16 %v563, %v562
        %v573 = vpack.c.b16 %v565, %v564
        %582 = vmatpush.bf16.msra.mxu0 %v573
        %583 = vmatpush.bf16.msra.mxu0 %v572
        %584 = vmatpush.bf16.msra.mxu0 %v571
        %585 = vmatpush.bf16.msra.mxu0 %v570
        %586 = vmatpush.bf16.msra.mxu0 %v569
        %587 = vmatpush.bf16.msra.mxu0 %v568
        %588 = vmatpush.bf16.msra.mxu0 %v567
        %589 = vmatpush.bf16.msra.mxu0 %v566
        %590 = vmatmul.bf16.gmra.mxu0 %v513
        %v591 = vpop.f32.mrf.mxu0
        %v592 = vadd.f32 %v532, %v591
        %v593 = vpop.f32.mrf.mxu0
        %594 = vdwg.mxu0
        %v595 = vsub.f32 0.0, %v592
        %v596 = vmul.f32 %v595, 1.442695
        %v597 = vpow.pop %v596
        %v598 = vadd.f32 %v597, 1.0
        %v599 = vrcp.pop %v598
        %600 = vst [vmem:[%s345] sm:$0xff] %v599
        %s601 = sand.u32 %s186, 1
        %s602 = scalar_lea.sflag [#allocation4], %s601
        %s603 = sand.u32 %s186, 1
        %s604 = smul.addr %s603, 8
        %s605 = scalar_lea.vmem [#allocation10], %s604
        // Predicated region
        $region65: #{tpu_custom_call.1} parent=47 // pred_check
          %p606 = pneg %p196
        $region66: #{tpu_custom_call.1} parent=47 // pred_check_branch
          %608 = sbr.rel (%p606) target = $region68
        $region67: #{tpu_custom_call.1} parent=47 // pred_region
          %610 = vsyncadd %s602, 0
          %s611 = smul.addr %s26, 8
          %s612 = scalar_lea.hbm %s7, %s611
          %s614 = sshll.u32 %s605, 4
          %s615 = int_to_ptr.vmem [resolvable:$true] %s614
          %s616 = sshll.u32 %s612, 4
          %s617 = int_to_ptr.hbm [resolvable:$true] %s616
          %619 = dma.vmem_to_hbm [thread:$0]  %s615, 128, %s617, %s602
        $region68: #{tpu_custom_call.1} parent=47 // pred_fallthru
          _
      $region48: #{tpu_custom_call.1} parent=5 // pred_fallthru
        _
      %p620 = scmp.le.s32.totalorder 2, %s21
      // Predicated region
      $region69: #{tpu_custom_call.1} parent=5 // pred_check
        %p621 = pneg %p620
      $region70: #{tpu_custom_call.1} parent=5 // pred_check_branch
        %623 = sbr.rel (%p621) target = $region72
      $region71: #{tpu_custom_call.1} parent=5 // pred_region
        %s624 = ssub.s32 %s21, 2
        // Predicated region
        $region73: #{tpu_custom_call.1} parent=71 // pred_check
          %p625 = pneg %p202
        $region74: #{tpu_custom_call.1} parent=71 // pred_check_branch
          %627 = sbr.rel (%p625) target = $region76
        $region75: #{tpu_custom_call.1} parent=71 // pred_region
          %s628 = sand.u32 %s187, 1
          %s629 = scalar_lea.sflag [#allocation4], %s628
          %s630 = sand.u32 %s187, 1
          %s631 = smul.addr %s630, 8
          %s632 = scalar_lea.vmem [#allocation10], %s631
          %634 = dma.done %s629, 128
        $region76: #{tpu_custom_call.1} parent=71 // pred_fallthru
          _
      $region72: #{tpu_custom_call.1} parent=5 // pred_fallthru
        _
    $region6: #{tpu_custom_call.1} parent=1 // loop_footer
      %s25 = sadd.s32 1, %s21
    $region7: #{tpu_custom_call.1} parent=1 // loop_footer_branch
      %20 = sbr.rel target = $region3
    $region8: #{tpu_custom_call.1} parent=1 // loop_exit
      _
    %635 = vsyncpa [#allocation3], 1
    %s636 = scalar_lea.sflag [#allocation3], 1
    %637 = vsyncpa %s636, 1
    %638 = vsyncpa [#allocation6], 1
    %639 = vsyncpa [#allocation9], 1
    %640 = vsyncpa [#allocation4], 1
    %s641 = scalar_lea.sflag [#allocation4], 1
    %642 = vsyncpa %s641, 1

</llo_original>
